<compile_context>
chip_gen: v5e
topology: v5e:2x2
jax: 0.10.0
libtpu: 0.0.40
codegen_flags: <defaults>
</compile_context>

<pallas_src>
import jax
import jax.numpy as jnp
from jax.experimental import pallas as pl
from jax.experimental.pallas import tpu as pltpu

_LANE = 128                       # vreg lane width (last dim)
_SUBLANE = 8                      # f32 sublanes (second-to-last dim)
_TILE_BYTES_TARGET = 2 * 1024 * 1024   # ~2 MiB/tile -> ~8 MiB live (2 in + 2 out bufs)


def _sublane(itemsize: int) -> int:
    # Sublane packing multiple per dtype width: f32 -> 8, bf16 -> 16, int8/fp8 -> 32.
    return max(_SUBLANE, 32 // max(itemsize, 1))


def _choose_tiles(b: int, d: int, itemsize: int):
    """Pick (tile_b, tile_d) so one tile is ~_TILE_BYTES_TARGET bytes."""
    sub = _sublane(itemsize)

    # Feature tiling only when even a single `sub`-row block blows the budget.
    if sub * d * itemsize > _TILE_BYTES_TARGET:
        tile_d = max(_LANE, ((_TILE_BYTES_TARGET // (sub * itemsize)) // _LANE) * _LANE)
    else:
        tile_d = d   # full feature dim: exempt from the lane-multiple rule

    # Largest sublane-aligned batch tile that keeps the tile near the byte target.
    tile_b = _TILE_BYTES_TARGET // max(tile_d * itemsize, 1)
    tile_b = max(sub, (tile_b // sub) * sub)

    if b <= sub:
        tile_b = b   # full batch dim: exempt from the sublane-multiple rule
    else:
        # Keep >= 2 grid steps along the parallel batch axis (v7x megacore sharding).
        half = -(-((b + 1) // 2) // sub) * sub
        tile_b = min(tile_b, half)
    return tile_b, tile_d


def _tanh_kernel(x_ref, o_ref):
    # Whole tile in one shot; native dtype (EUP tanh, bf16-native on v6e/v7x).
    o_ref[...] = jnp.tanh(x_ref[...])


def tanh_jacobian_forward(x):
    """Pallas equivalent of TanhJacobian.forward.

    Arguments
    ---------
    x : array of shape (batch_size, dim)

    Returns
    -------
    (tanh(x), cache) where cache is the (unmodified) input, exactly as in PyTorch.
    """
    assert x.ndim == 2, "TanhJacobian.forward expects (batch_size, dim)"
    b, d = x.shape
    cache = x

    # Lane-dense re-view (free row-major reshape, no HBM copy): full-width stores
    # instead of masked partial-lane stores when the feature dim is not 128-aligned.
    view = x
    if d % _LANE != 0 and (b * d) % _LANE == 0 and (b * d) >= _LANE:
        view = x.reshape(-1, _LANE)

    vb, vd = view.shape
    tile_b, tile_d = _choose_tiles(vb, vd, view.dtype.itemsize)
    grid = (pl.cdiv(vb, tile_b), pl.cdiv(vd, tile_d))

    out = pl.pallas_call(
        _tanh_kernel,
        out_shape=jax.ShapeDtypeStruct((vb, vd), view.dtype),
        grid=grid,
        in_specs=[pl.BlockSpec((tile_b, tile_d), lambda i, j: (i, j))],
        out_specs=pl.BlockSpec((tile_b, tile_d), lambda i, j: (i, j)),
        compiler_params=pltpu.CompilerParams(
            dimension_semantics=("parallel", "parallel")),
    )(view)

    if out.shape != (b, d):
        out = out.reshape(b, d)
    return out, cache


# TODO(synk): TanhJacobian.backward (accumulated-Jacobian einsums over dout / pi_dout)
# is not part of the forward pass and is not implemented here.


if __name__ == "__main__":
    key = jax.random.PRNGKey(0)
    k1, k2, k3, k4 = jax.random.split(key, 4)

    # Shape implied by the module's forward: (batch_size, dim).
    x_small = jax.random.normal(k1, (2, 32), dtype=jnp.float32)
    out_small, cache_small = tanh_jacobian_forward(x_small)
    jax.block_until_ready(out_small)
    assert out_small.shape == x_small.shape, out_small.shape
    assert jnp.allclose(out_small, jnp.tanh(x_small), atol=1e-5, rtol=1e-5)
    assert jnp.array_equal(cache_small, x_small)

    # Ragged shape: partial trailing batch block, no padding, 2 grid steps.
    x_big = jax.random.normal(k2, (300, 70), dtype=jnp.float32)
    out_big, cache_big = tanh_jacobian_forward(x_big)
    jax.block_until_ready(out_big)
    assert out_big.shape == x_big.shape, out_big.shape
    assert jnp.allclose(out_big, jnp.tanh(x_big), atol=1e-5, rtol=1e-5)
    assert jnp.array_equal(cache_big, x_big)

    # Lane-dense re-view path: d % 128 != 0 but b*d % 128 == 0.
    x_view = jax.random.normal(k3, (16, 24), dtype=jnp.float32)
    out_view, cache_view = tanh_jacobian_forward(x_view)
    jax.block_until_ready(out_view)
    assert out_view.shape == x_view.shape, out_view.shape
    assert jnp.allclose(out_view, jnp.tanh(x_view), atol=1e-5, rtol=1e-5)
    assert jnp.array_equal(cache_view, x_view)

    # bf16: evaluated in native dtype (no forced f32 upcast).
    x_bf16 = jax.random.normal(k4, (48, 70), dtype=jnp.float32).astype(jnp.bfloat16)
    out_bf16, cache_bf16 = tanh_jacobian_forward(x_bf16)
    jax.block_until_ready(out_bf16)
    assert out_bf16.shape == x_bf16.shape, out_bf16.shape
    ref_bf16 = jnp.tanh(x_bf16.astype(jnp.float32))
    assert jnp.allclose(out_bf16.astype(jnp.float32), ref_bf16, atol=5e-2, rtol=5e-2)
    assert jnp.array_equal(cache_bf16, x_bf16)

    print("KERNEL_OK")
</pallas_src>

<mosaic_0001>
module attributes {stable_mosaic.version = 11 : i64} {
  func.func @_tanh_kernel(%arg0: i32, %arg1: i32, %arg2: memref<2x32xf32, #tpu.memory_space<vmem>>, %arg3: memref<2x32xf32, #tpu.memory_space<vmem>>) attributes {dimension_semantics = [#tpu.dimension_semantics<parallel>, #tpu.dimension_semantics<parallel>], iteration_bounds = array<i64: 1, 1>, scalar_prefetch = 0 : i64, scratch_operands = 0 : i64, tpu.core_type = #tpu.core_type<tc>, window_params = [{transform_indices = @transform_0, window_bounds = array<i64: 2, 32>}, {transform_indices = @transform_1, window_bounds = array<i64: 2, 32>}]} {
    %c0 = arith.constant 0 : index
    %c0_0 = arith.constant 0 : index
    %0 = vector.load %arg2[%c0, %c0_0] : memref<2x32xf32, #tpu.memory_space<vmem>>, vector<2x32xf32>
    %1 = math.tanh %0 : vector<2x32xf32>
    %c0_1 = arith.constant 0 : index
    %c0_2 = arith.constant 0 : index
    %2 = vector.load %arg3[%c0_1, %c0_2] : memref<2x32xf32, #tpu.memory_space<vmem>>, vector<2x32xf32>
    tpu.vector_store %arg3[%c0_1, %c0_2], %1 {strides = array<i32>} : memref<2x32xf32, #tpu.memory_space<vmem>>, vector<2x32xf32>,
    return
  }
  func.func @transform_0(%arg0: i32, %arg1: i32) -> (i32, i32) {
    %c0_i32 = arith.constant 0 : i32
    return %arg0, %arg1 : i32, i32
  }
  func.func @transform_1(%arg0: i32, %arg1: i32) -> (i32, i32) {
    %c0_i32 = arith.constant 0 : i32
    return %arg0, %arg1 : i32, i32
  }
}

</mosaic_0001>

<llo_original>
// kernel: tpu_custom_call.1
$region0: #{tpu_custom_call.1}
  #allocation0 [shape = 'u32[]', space=smem, size = 0x4, offset = 0x4, fixed_abs, tag = 'smem constant byte address 0x4 - core index']
  #allocation1 [shape = 'u32[72,128]{1,0:T(1,128)}', space=vmem, size = 0x9000, scoped, tag = 'internal scratch']
  %s0 = inlined_call_operand.hbm [shape: f32[2,32], index: 0, kind: input, shape index: {}]
  %s1 = inlined_call_operand.hbm [shape: f32[2,32], index: 1, kind: output, shape index: {}]
  %s2 = sld [smem:[#allocation0]]
  $region18: #{tpu_custom_call.1} parent=0
    _
  %s4 = ssub.s32 1, %s2
  %s5 = scalar_select 0, %s4, %s2
  $region1: #{tpu_custom_call.1} parent=0
    #allocation2 [shape = 'u8[1024]{0}', space=vmem, size = 0x400, scoped, tag = 'input window, operand 0, single buffered']
    #allocation3 [shape = 's32[1]{0}', space=sflag, size = 0x4, scoped, tag = 'scoped memory for tpu_custom_call.1']
    #allocation4 [shape = 's32[1]{0}', space=sflag, size = 0x4, scoped, tag = 'scoped memory for tpu_custom_call.1']
    #allocation5 [shape = 'u8[1024]{0}', space=vmem, size = 0x400, scoped, tag = 'output window, operand 0, single buffered']
    %6 = vsyncpa [#allocation3], 0
    %7 = vsyncpa [#allocation4], 0
    // Predicated region
    $region2: #{tpu_custom_call.1} parent=1 // pred_check
      _
    $region3: #{tpu_custom_call.1} parent=1 // pred_check_branch
      %9 = sbr.rel (0) target = $region5
    $region4: #{tpu_custom_call.1} parent=1 // pred_region
      %11 = vsyncadd [#allocation3], 0
      %s13 = sshll.u32 %s0, 4
      %s14 = int_to_ptr.hbm [resolvable:$true] %s13
      %s15 = sshll.u32 [#allocation2], 4
      %s16 = int_to_ptr.vmem [resolvable:$true] %s15
      %18 = dma.hbm_to_vmem [thread:$0]  %s14, 32, %s16, [#allocation3]
    $region5: #{tpu_custom_call.1} parent=1 // pred_fallthru
      _
    // Predicated region
    $region6: #{tpu_custom_call.1} parent=1 // pred_check
      _
    $region7: #{tpu_custom_call.1} parent=1 // pred_check_branch
      %20 = sbr.rel (0) target = $region9
    $region8: #{tpu_custom_call.1} parent=1 // pred_region
      %22 = dma.done [#allocation3], 32
    $region9: #{tpu_custom_call.1} parent=1 // pred_fallthru
      _
    %v23 = vld [vmem:[#allocation2] sm:$0x3]
    %v24 = vtanh.pop %v23
    %vm25 = vcmask 254976
    %26 = vst.msk [vmem:[#allocation5] sm:$0x3] %vm25, %v24
    // Predicated region
    $region10: #{tpu_custom_call.1} parent=1 // pred_check
      _
    $region11: #{tpu_custom_call.1} parent=1 // pred_check_branch
      %28 = sbr.rel (0) target = $region13
    $region12: #{tpu_custom_call.1} parent=1 // pred_region
      %30 = vsyncadd [#allocation4], 0
      %s32 = sshll.u32 [#allocation5], 4
      %s33 = int_to_ptr.vmem [resolvable:$true] %s32
      %s34 = sshll.u32 %s1, 4
      %s35 = int_to_ptr.hbm [resolvable:$true] %s34
      %37 = dma.vmem_to_hbm [thread:$0]  %s33, 32, %s35, [#allocation4]
    $region13: #{tpu_custom_call.1} parent=1 // pred_fallthru
      _
    // Predicated region
    $region14: #{tpu_custom_call.1} parent=1 // pred_check
      _
    $region15: #{tpu_custom_call.1} parent=1 // pred_check_branch
      %39 = sbr.rel (0) target = $region17
    $region16: #{tpu_custom_call.1} parent=1 // pred_region
      %41 = dma.done [#allocation4], 32
    $region17: #{tpu_custom_call.1} parent=1 // pred_fallthru
      _
    %42 = vsyncpa [#allocation3], 1
    %43 = vsyncpa [#allocation4], 1

</llo_original>
